<compile_context>
chip_gen: v5e
topology: v5e:2x2
jax: 0.10.0
libtpu: 0.0.40
codegen_flags: <defaults>
</compile_context>

<pallas_src>
import functools
import math

import jax
import jax.numpy as jnp
from jax.experimental import pallas as pl
from jax.experimental.pallas import tpu as pltpu


def make_positional_encoding(max_len, d_model, dtype=jnp.float32):
    """Same pe buffer as the PyTorch __init__ (shape (1, max_len, d_model))."""
    position = jnp.arange(max_len, dtype=jnp.float32)[:, None]
    div_term = jnp.exp(
        jnp.arange(0, d_model, 2, dtype=jnp.float32) * -(math.log(10000.0) / d_model)
    )
    angles = position * div_term  # (max_len, d_model//2)
    pe = jnp.zeros((max_len, d_model), dtype=jnp.float32)
    pe = pe.at[:, 0::2].set(jnp.sin(angles))
    pe = pe.at[:, 1::2].set(jnp.cos(angles))
    return pe[None].astype(dtype)  # (1, max_len, d_model)


def _pe_kernel(seed_ref, x_ref, pe_ref, o_ref, *, dropout_p, train, total_l):
    """One (TILE_B, TILE_L) tile: add positional encoding, optional dropout.

    seed_ref: (1,) int32 in SMEM (scalar prefetch)
    x_ref   : (TILE_B, TILE_L) tokens, lane axis = flattened (S*D)
    pe_ref  : (1, TILE_L)      positional-encoding slab (broadcast over sublanes)
    o_ref   : (TILE_B, TILE_L)
    """
    y = x_ref[...] + pe_ref[...]  # broadcast (1, TILE_L) over batch rows

    if train and dropout_p >= 1.0:
        # p == 1.0: everything is dropped (avoids threshold wraparound / inf scale).
        y = jnp.zeros_like(y)
    elif train and dropout_p > 0.0:
        tb, tl = y.shape
        j = pl.program_id(0)  # lane-tile index (outer grid axis)
        i = pl.program_id(1)  # batch-tile index (inner grid axis)
        row = (jax.lax.broadcasted_iota(jnp.int32, y.shape, 0) + i * tb).astype(jnp.uint32)
        col = (jax.lax.broadcasted_iota(jnp.int32, y.shape, 1) + j * tl).astype(jnp.uint32)
        # Counter-based hash of the global element index + seed (no TPU PRNG primitive).
        h = row * jnp.uint32(total_l & 0xFFFFFFFF) + col
        h = h + seed_ref[0].astype(jnp.uint32) * jnp.uint32(0x9E3779B9)
        h = h ^ (h >> 16)
        h = h * jnp.uint32(0x7FEB352D)
        h = h ^ (h >> 15)
        h = h * jnp.uint32(0x846CA68B)
        h = h ^ (h >> 16)
        threshold = jnp.uint32(min(int(round(dropout_p * 2.0 ** 32)), 2 ** 32 - 1))
        keep = h >= threshold  # P(keep) = 1 - p
        # Keep the arithmetic in the input dtype (bf16 VALU on v6e/v7x).
        scale = jnp.asarray(1.0 / (1.0 - dropout_p), y.dtype)
        y = jnp.where(keep, y * scale, jnp.zeros_like(y))

    o_ref[...] = y.astype(o_ref.dtype)


def _round_up(x, m):
    return ((x + m - 1) // m) * m


def _round_down(x, m):
    return (x // m) * m


def _choose_tiles(n_rows, n_lanes, dtype_bytes, budget_bytes=4 << 20):
    """Jointly pick (tile_b, tile_l) against a per-tile byte budget (~4 MiB).

    tile_l is a multiple of 128 (or the full lane extent); tile_b a multiple of
    the sublane grain (or the full batch extent).  The grid uses pl.cdiv, so
    neither needs to divide the array exactly (Pallas masks the ragged block).
    """
    row_grain = max(8, 32 // dtype_bytes)  # 8 for f32, 16 for bf16, 32 for int8
    budget_elems = max(budget_bytes // dtype_bytes, row_grain * 128)

    # Rows a tile could usefully hold (cap at 512 so big-B grids still split).
    max_rows = n_rows if n_rows <= row_grain else min(_round_up(n_rows, row_grain), 512)

    lane_cap = max(_round_down(budget_elems // max_rows, 128), 128)
    if n_lanes <= lane_cap or n_lanes <= 512:
        tile_l = n_lanes  # full lane extent: contiguous DMA, single pe fetch
    else:
        tile_l = lane_cap

    rows = max(budget_elems // tile_l, row_grain)
    if n_rows <= rows and n_rows <= 512:
        tile_b = n_rows  # full batch extent (always legal)
    else:
        tile_b = min(max(_round_down(rows, row_grain), row_grain), 512)
    return tile_b, tile_l


def positional_encoding_forward(x, pe, *, dropout_p=0.1, train=False, seed=0):
    """x: (B, S, D); pe: (1, max_len, D). Returns (B, S, D)."""
    if not 0.0 <= float(dropout_p) <= 1.0:
        raise ValueError(f"dropout_p must be in [0, 1], got {dropout_p}")

    B, S, D = x.shape
    L = S * D

    # Lane-dense layout: flatten (S, D) onto the lane axis.
    x2 = x.reshape(B, L)
    pe2 = pe[:, :S, :].reshape(1, L).astype(x.dtype)

    tile_b, tile_l = _choose_tiles(B, L, x.dtype.itemsize)
    # Lane tiles outer, batch tiles inner (last grid axis is the innermost loop),
    # so pe's block index is constant across consecutive steps -> DMA skipped.
    grid = (pl.cdiv(L, tile_l), pl.cdiv(B, tile_b))

    seed_arr = jnp.array([seed], dtype=jnp.int32)
    kernel = functools.partial(
        _pe_kernel, dropout_p=float(dropout_p), train=bool(train), total_l=L
    )

    grid_spec = pltpu.PrefetchScalarGridSpec(
        num_scalar_prefetch=1,
        grid=grid,
        in_specs=[
            pl.BlockSpec((tile_b, tile_l), lambda j, i, seed: (i, j)),  # x tile
            pl.BlockSpec((1, tile_l), lambda j, i, seed: (0, j)),       # pe slab
        ],
        out_specs=pl.BlockSpec((tile_b, tile_l), lambda j, i, seed: (i, j)),
    )

    out = pl.pallas_call(
        kernel,
        out_shape=jax.ShapeDtypeStruct((B, L), x.dtype),
        grid_spec=grid_spec,
        compiler_params=pltpu.CompilerParams(
            dimension_semantics=("parallel", "parallel"),
            vmem_limit_bytes=48 << 20,  # safe on v5e/v6e (128 MiB) and v7x (64 MiB)
        ),
    )(seed_arr, x2, pe2)

    return out.reshape(B, S, D)


def positional_encoding_reference(x, pe):
    """Pure-JAX reference of the forward pass with dropout disabled (eval)."""
    return x + pe[:, : x.shape[1]]


if __name__ == "__main__":
    # Small shapes consistent with the module: batch=2, seq=8, d_model=32.
    B, S, D = 2, 8, 32
    MAX_LEN = 500
    DROPOUT_P = 0.1

    key = jax.random.PRNGKey(0)
    x = jax.random.normal(key, (B, S, D), dtype=jnp.float32)
    pe = make_positional_encoding(MAX_LEN, D)

    # Eval mode (dropout = identity): must match the reference exactly.
    out_eval = positional_encoding_forward(x, pe, dropout_p=DROPOUT_P, train=False)
    jax.block_until_ready(out_eval)
    ref = positional_encoding_reference(x, pe)
    assert out_eval.shape == (B, S, D)
    assert jnp.allclose(out_eval, ref, atol=1e-6, rtol=1e-6), "mismatch vs reference (eval)"

    # Train mode: every output element is either dropped (0) or (x+pe)/(1-p).
    out_train = positional_encoding_forward(x, pe, dropout_p=DROPOUT_P, train=True, seed=0)
    jax.block_until_ready(out_train)
    expected_kept = ref / (1.0 - DROPOUT_P)
    ok = jnp.isclose(out_train, 0.0, atol=1e-6) | jnp.isclose(
        out_train, expected_kept, atol=1e-5, rtol=1e-5
    )
    assert out_train.shape == (B, S, D)
    assert bool(jnp.all(ok)), "dropout output not in {0, (x+pe)/(1-p)}"

    print("KERNEL_OK")
</pallas_src>

<mosaic_0001>
module attributes {stable_mosaic.version = 11 : i64} {
  func.func @_pe_kernel(%arg0: i32, %arg1: i32, %arg2: memref<1xi32, #tpu.memory_space<smem>>, %arg3: memref<2x256xf32, #tpu.memory_space<vmem>>, %arg4: memref<1x256xf32, #tpu.memory_space<vmem>>, %arg5: memref<2x256xf32, #tpu.memory_space<vmem>>) attributes {dimension_semantics = [#tpu.dimension_semantics<parallel>, #tpu.dimension_semantics<parallel>], iteration_bounds = array<i64: 1, 1>, scalar_prefetch = 1 : i64, scratch_operands = 0 : i64, tpu.core_type = #tpu.core_type<tc>, window_params = [{transform_indices = @transform_0, window_bounds = array<i64: 2, 256>}, {transform_indices = @transform_1, window_bounds = array<i64: 1, 256>}, {transform_indices = @transform_2, window_bounds = array<i64: 2, 256>}]} {
    %c0 = arith.constant 0 : index
    %c0_0 = arith.constant 0 : index
    %0 = vector.load %arg3[%c0, %c0_0] : memref<2x256xf32, #tpu.memory_space<vmem>>, vector<2x256xf32>
    %c0_1 = arith.constant 0 : index
    %c0_2 = arith.constant 0 : index
    %1 = vector.load %arg4[%c0_1, %c0_2] : memref<1x256xf32, #tpu.memory_space<vmem>>, vector<1x256xf32>
    %2 = vector.broadcast %1 : vector<1x256xf32> to vector<2x256xf32>
    %3 = arith.addf %0, %2 : vector<2x256xf32>
    %c0_3 = arith.constant 0 : index
    %c0_4 = arith.constant 0 : index
    %4 = vector.load %arg5[%c0_3, %c0_4] : memref<2x256xf32, #tpu.memory_space<vmem>>, vector<2x256xf32>
    tpu.vector_store %arg5[%c0_3, %c0_4], %3 {strides = array<i32>} : memref<2x256xf32, #tpu.memory_space<vmem>>, vector<2x256xf32>,
    return
  }
  func.func @transform_0(%arg0: i32, %arg1: i32, %arg2: memref<1xi32, #tpu.memory_space<smem>>) -> (i32, i32) {
    %c0_i32 = arith.constant 0 : i32
    return %arg1, %arg0 : i32, i32
  }
  func.func @transform_1(%arg0: i32, %arg1: i32, %arg2: memref<1xi32, #tpu.memory_space<smem>>) -> (i32, i32) {
    %c0_i32 = arith.constant 0 : i32
    %c0_i32_0 = arith.constant 0 : i32
    return %c0_i32, %arg0 : i32, i32
  }
  func.func @transform_2(%arg0: i32, %arg1: i32, %arg2: memref<1xi32, #tpu.memory_space<smem>>) -> (i32, i32) {
    %c0_i32 = arith.constant 0 : i32
    return %arg1, %arg0 : i32, i32
  }
}

</mosaic_0001>

<llo_original>
// kernel: tpu_custom_call.1
$region0: #{tpu_custom_call.1}
  #allocation0 [shape = 'u32[]', space=smem, size = 0x4, offset = 0x4, fixed_abs, tag = 'smem constant byte address 0x4 - core index']
  #allocation1 [shape = 'u32[72,128]{1,0:T(1,128)}', space=vmem, size = 0x9000, scoped, tag = 'internal scratch']
  #allocation2 [shape = 's32[1]{0}', space=sflag, size = 0x4, scoped, tag = 'scoped memory for tpu_custom_call.1']
  #allocation3 [shape = 's32[1]{0:T(128)S(6)}', space=smem, size = 0x200, scoped, tag = 'prefetched SMEM operand 0']
  %s0 = inlined_call_operand.<no memory space> [shape: s32[1], index: 0, kind: input, shape index: {}]
  %s1 = inlined_call_operand.hbm [shape: f32[2,256], index: 1, kind: input, shape index: {}]
  %s2 = inlined_call_operand.vmem [shape: f32[1,256], index: 2, kind: input, shape index: {}]
  %s3 = inlined_call_operand.hbm [shape: f32[2,256], index: 3, kind: output, shape index: {}]
  %s4 = sld [smem:[#allocation0]]
  $region22: #{tpu_custom_call.1} parent=0
    _
  %s6 = ssub.s32 1, %s4
  %s7 = scalar_select 0, %s6, %s4
  %8 = sst [smem:[#allocation3]] %s0
  $region1: #{tpu_custom_call.1} parent=0
    #allocation4 [shape = 'u8[2048]{0}', space=vmem, size = 0x800, scoped, tag = 'input window, operand 1, single buffered']
    #allocation5 [shape = 's32[1]{0}', space=sflag, size = 0x4, scoped, tag = 'scoped memory for tpu_custom_call.1']
    #allocation6 [shape = 's32[1]{0}', space=sflag, size = 0x4, scoped, tag = 'scoped memory for tpu_custom_call.1']
    #allocation7 [shape = 'u8[2048]{0}', space=vmem, size = 0x800, scoped, tag = 'output window, operand 0, single buffered']
    %9 = vsyncpa [#allocation5], 0
    %10 = vsyncpa [#allocation6], 0
    // Predicated region
    $region2: #{tpu_custom_call.1} parent=1 // pred_check
      _
    $region3: #{tpu_custom_call.1} parent=1 // pred_check_branch
      %12 = sbr.rel (0) target = $region5
    $region4: #{tpu_custom_call.1} parent=1 // pred_region
      %14 = vsyncadd [#allocation5], 0
      %s16 = sshll.u32 %s1, 4
      %s17 = int_to_ptr.hbm [resolvable:$true] %s16
      %s18 = sshll.u32 [#allocation4], 4
      %s19 = int_to_ptr.vmem [resolvable:$true] %s18
      %21 = dma.hbm_to_vmem [thread:$0]  %s17, 64, %s19, [#allocation5]
    $region5: #{tpu_custom_call.1} parent=1 // pred_fallthru
      _
    // Predicated region
    $region6: #{tpu_custom_call.1} parent=1 // pred_check
      _
    $region7: #{tpu_custom_call.1} parent=1 // pred_check_branch
      %23 = sbr.rel (0) target = $region9
    $region8: #{tpu_custom_call.1} parent=1 // pred_region
      _
    $region9: #{tpu_custom_call.1} parent=1 // pred_fallthru
      _
    // Predicated region
    $region10: #{tpu_custom_call.1} parent=1 // pred_check
      _
    $region11: #{tpu_custom_call.1} parent=1 // pred_check_branch
      %25 = sbr.rel (0) target = $region13
    $region12: #{tpu_custom_call.1} parent=1 // pred_region
      %27 = dma.done [#allocation5], 64
    $region13: #{tpu_custom_call.1} parent=1 // pred_fallthru
      _
    %v28 = vld [vmem:[#allocation4] sm:$0xf]
    %v29 = vld [vmem:[%s2] sm:$0x3]
    %v31 = vperm.slane %v29, 0
    %v32 = vperm.slane %v29, 1
    %v33 = vrot.slane %v32, 6
    %vm34 = vcmask 1041408
    %v35 = vsel %vm34, %v31, %v33
    %v37 = vadd.f32 %v28, %v35
    %38 = vst [vmem:[#allocation7] sm:$0xf] %v37
    // Predicated region
    $region14: #{tpu_custom_call.1} parent=1 // pred_check
      _
    $region15: #{tpu_custom_call.1} parent=1 // pred_check_branch
      %40 = sbr.rel (0) target = $region17
    $region16: #{tpu_custom_call.1} parent=1 // pred_region
      %42 = vsyncadd [#allocation6], 0
      %s44 = sshll.u32 [#allocation7], 4
      %s45 = int_to_ptr.vmem [resolvable:$true] %s44
      %s46 = sshll.u32 %s3, 4
      %s47 = int_to_ptr.hbm [resolvable:$true] %s46
      %49 = dma.vmem_to_hbm [thread:$0]  %s45, 64, %s47, [#allocation6]
    $region17: #{tpu_custom_call.1} parent=1 // pred_fallthru
      _
    // Predicated region
    $region18: #{tpu_custom_call.1} parent=1 // pred_check
      _
    $region19: #{tpu_custom_call.1} parent=1 // pred_check_branch
      %51 = sbr.rel (0) target = $region21
    $region20: #{tpu_custom_call.1} parent=1 // pred_region
      %53 = dma.done [#allocation6], 64
    $region21: #{tpu_custom_call.1} parent=1 // pred_fallthru
      _
    %54 = vsyncpa [#allocation5], 1
    %55 = vsyncpa [#allocation6], 1

</llo_original>
